<compile_context>
chip_gen: v7x
topology: tpu7x:2x2x1
jax: 0.10.0
libtpu: 0.0.40
codegen_flags: <defaults>
</compile_context>

<pallas_src>
import jax
import jax.numpy as jnp
from jax.experimental import pallas as pl
from jax.experimental.pallas import tpu as pltpu


def _ffn_kernel(x_ref, w13_ref, w2t_ref, o_ref, acc_ref):
    k = pl.program_id(1)

    @pl.when(k == 0)
    def _():
        acc_ref[...] = jnp.zeros_like(acc_ref)

    x = x_ref[...]            # (tile_m, dim)        resident across the k loop
    w13 = w13_ref[...]        # (dim, 2*tile_h)      [w1 cols | w3 cols] of tile k
    w2t = w2t_ref[...]        # (tile_h, dim)        w2^T rows of tile k
    tile_h = w2t.shape[0]

    # Fused gate+up projection for this hidden tile: one MXU dot, no .T.
    h = jnp.dot(x, w13, preferred_element_type=jnp.float32)   # (tile_m, 2*tile_h)
    h1 = h[:, :tile_h]
    h3 = h[:, tile_h:]

    # SwiGLU gate in f32 (sigmoid runs on the EUP), downcast for the MXU.
    g = (h1 * jax.nn.sigmoid(h1)) * h3                         # (tile_m, tile_h)

    # Partial down-projection, accumulated over hidden tiles in f32.
    acc_ref[...] += jnp.dot(g.astype(w2t.dtype), w2t,
                            preferred_element_type=jnp.float32)

    @pl.when(k == pl.num_programs(1) - 1)
    def _():
        o_ref[...] = acc_ref[...].astype(o_ref.dtype)


def _pick_tile_h(hidden, requested):
    """Largest multiple-of-128 divisor of `hidden` that is <= requested."""
    if hidden <= requested:
        return hidden
    best = None
    t = 128
    while t <= requested:
        if hidden % t == 0:
            best = t
        t += 128
    return best if best is not None else hidden


def feed_forward(x, w1, w2, w3, *, tile_m=256, tile_h=512, compute_dtype=None):
    """SwiGLU FFN forward.

    x : (..., dim)
    w1: (hidden, dim)   nn.Linear(dim -> hidden) weight
    w2: (dim, hidden)   nn.Linear(hidden -> dim) weight
    w3: (hidden, dim)   nn.Linear(dim -> hidden) weight
    """
    orig_shape = x.shape
    out_dtype = x.dtype
    dim = orig_shape[-1]
    hidden = w1.shape[0]

    if compute_dtype is not None:
        x = x.astype(compute_dtype)
        w1 = w1.astype(compute_dtype)
        w2 = w2.astype(compute_dtype)
        w3 = w3.astype(compute_dtype)

    x2d = x.reshape(-1, dim)
    M = x2d.shape[0]

    # --- hidden tiling -------------------------------------------------------
    tile_h = _pick_tile_h(hidden, tile_h)
    n_h = hidden // tile_h

    # --- weight layout plumbing (in real use done ONCE at weight-load time) --
    # Fused gate/up weight: block k (width 2*tile_h) = [w1 cols of tile k | w3 cols of tile k].
    w1t = w1.T.reshape(dim, n_h, tile_h)
    w3t = w3.T.reshape(dim, n_h, tile_h)
    w13 = jnp.concatenate([w1t, w3t], axis=-1).reshape(dim, 2 * hidden)
    w2t = w2.T                                       # (hidden, dim)

    # --- token (M) tiling, pad ragged tail -----------------------------------
    if M <= tile_m:
        tile_m = M                                   # single full block (any M)
        pad_m = 0
    else:
        tile_m = (tile_m // 8) * 8                   # keep sublane-aligned
        pad_m = (-M) % tile_m
        if pad_m:
            x2d = jnp.pad(x2d, ((0, pad_m), (0, 0)))
    m_padded = M + pad_m

    # --- VMEM budget (double-buffered inputs/outputs + f32 accumulator) ------
    in_bytes = jnp.dtype(x2d.dtype).itemsize
    out_bytes = jnp.dtype(out_dtype).itemsize
    vmem_bytes = (
        2 * tile_m * dim * in_bytes            # x tile
        + 2 * dim * 2 * tile_h * in_bytes      # fused w1/w3 tile
        + 2 * tile_h * dim * in_bytes          # w2^T tile
        + 2 * tile_m * dim * out_bytes         # out tile
        + tile_m * dim * 4                     # f32 accumulator scratch
    )
    vmem_limit = min(max(int(1.5 * vmem_bytes), 8 << 20), 64 << 20)

    out = pl.pallas_call(
        _ffn_kernel,
        out_shape=jax.ShapeDtypeStruct((m_padded, dim), out_dtype),
        grid_spec=pltpu.PrefetchScalarGridSpec(
            num_scalar_prefetch=0,
            grid=(m_padded // tile_m, n_h),
            in_specs=[
                pl.BlockSpec((tile_m, dim), lambda m, k: (m, 0)),       # x (k-invariant)
                pl.BlockSpec((dim, 2 * tile_h), lambda m, k: (0, k)),   # fused w1/w3
                pl.BlockSpec((tile_h, dim), lambda m, k: (k, 0)),       # w2^T
            ],
            out_specs=pl.BlockSpec((tile_m, dim), lambda m, k: (m, 0)),
            scratch_shapes=[pltpu.VMEM((tile_m, dim), jnp.float32)],
        ),
        compiler_params=pltpu.CompilerParams(
            dimension_semantics=("parallel", "arbitrary"),
            vmem_limit_bytes=vmem_limit,
        ),
    )(x2d, w13, w2t)

    if pad_m:
        out = out[:M]
    return out.reshape(orig_shape)


def _reference(x, w1, w2, w3):
    h1 = x @ w1.T
    swish = h1 * jax.nn.sigmoid(h1)
    h3 = x @ w3.T
    return (swish * h3) @ w2.T


if __name__ == "__main__":
    # Small ModelArgs-equivalent: dim=128, multiple_of=128, no multiplier.
    #   hidden = 4*128 = 512 -> int(2*512/3) = 341 -> round up to 128 -> 384
    dim = 128
    multiple_of = 128
    hidden = 4 * dim
    hidden = int(2 * hidden / 3)
    hidden = multiple_of * ((hidden + multiple_of - 1) // multiple_of)  # 384

    batch, seq = 2, 8

    key = jax.random.PRNGKey(0)
    kx, k1, k2, k3 = jax.random.split(key, 4)
    x = jax.random.normal(kx, (batch, seq, dim), dtype=jnp.float32)
    w1 = jax.random.normal(k1, (hidden, dim), dtype=jnp.float32) * (dim ** -0.5)
    w2 = jax.random.normal(k2, (dim, hidden), dtype=jnp.float32) * (hidden ** -0.5)
    w3 = jax.random.normal(k3, (hidden, dim), dtype=jnp.float32) * (dim ** -0.5)

    ref = _reference(x, w1, w2, w3)

    # f32 path (matches the PyTorch module's default dtype).
    out_f32 = jax.block_until_ready(feed_forward(x, w1, w2, w3))
    assert out_f32.shape == (batch, seq, dim)
    assert jnp.allclose(out_f32, ref, atol=1e-3, rtol=1e-3)

    # bf16 compute path (f32 MXU accumulation) — wider tolerance vs f32 ref.
    out_bf16 = jax.block_until_ready(
        feed_forward(x, w1, w2, w3, compute_dtype=jnp.bfloat16))
    assert out_bf16.shape == (batch, seq, dim)
    assert jnp.allclose(out_bf16.astype(jnp.float32), ref, atol=5e-2, rtol=5e-2)

    print("KERNEL_OK")
</pallas_src>

<mosaic_0001>
module attributes {stable_mosaic.version = 11 : i64} {
  func.func @_ffn_kernel(%arg0: i32, %arg1: i32, %arg2: memref<16x128xf32, #tpu.memory_space<vmem>>, %arg3: memref<128x768xf32, #tpu.memory_space<vmem>>, %arg4: memref<384x128xf32, #tpu.memory_space<vmem>>, %arg5: memref<16x128xf32, #tpu.memory_space<vmem>>, %arg6: memref<16x128xf32, #tpu.memory_space<vmem>>) attributes {dimension_semantics = [#tpu.dimension_semantics<parallel>, #tpu.dimension_semantics<arbitrary>], iteration_bounds = array<i64: 1, 1>, scalar_prefetch = 0 : i64, scratch_operands = 1 : i64, tpu.core_type = #tpu.core_type<tc>, window_params = [{transform_indices = @transform_0, window_bounds = array<i64: 16, 128>}, {transform_indices = @transform_1, window_bounds = array<i64: 128, 768>}, {transform_indices = @transform_2, window_bounds = array<i64: 384, 128>}, {transform_indices = @transform_3, window_bounds = array<i64: 16, 128>}]} {
    %c0_i32 = arith.constant 0 : i32
    %0 = arith.cmpi eq, %arg1, %c0_i32 : i32
    %1 = arith.extui %0 : i1 to i32
    %c0_i32_0 = arith.constant 0 : i32
    %2 = arith.cmpi ne, %1, %c0_i32_0 : i32
    scf.if %2 {
      %cst_14 = arith.constant 0.000000e+00 : f32
      %23 = vector.broadcast %cst_14 : f32 to vector<16x128xf32>
      %c0_15 = arith.constant 0 : index
      %c0_16 = arith.constant 0 : index
      %24 = vector.load %arg6[%c0_15, %c0_16] : memref<16x128xf32, #tpu.memory_space<vmem>>, vector<16x128xf32>
      tpu.vector_store %arg6[%c0_15, %c0_16], %23 {strides = array<i32>} : memref<16x128xf32, #tpu.memory_space<vmem>>, vector<16x128xf32>,
    } else {
    }
    %c0 = arith.constant 0 : index
    %c0_1 = arith.constant 0 : index
    %3 = vector.load %arg2[%c0, %c0_1] : memref<16x128xf32, #tpu.memory_space<vmem>>, vector<16x128xf32>
    %c0_2 = arith.constant 0 : index
    %c0_3 = arith.constant 0 : index
    %4 = vector.load %arg3[%c0_2, %c0_3] : memref<128x768xf32, #tpu.memory_space<vmem>>, vector<128x768xf32>
    %c0_4 = arith.constant 0 : index
    %c0_5 = arith.constant 0 : index
    %5 = vector.load %arg4[%c0_4, %c0_5] : memref<384x128xf32, #tpu.memory_space<vmem>>, vector<384x128xf32>
    %cst = arith.constant dense<0.000000e+00> : vector<16x768xf32>
    %6 = tpu.matmul %3, %4, %cst {dimension_numbers = #tpu.dot_dimension_numbers<[1], [0], [0], [1], [0, 0, 1, 1], [], []>} : vector<16x128xf32>, vector<128x768xf32>, vector<16x768xf32> -> vector<16x768xf32>
    %7 = vector.extract_strided_slice %6 {offsets = [0, 0], sizes = [16, 384], strides = [1, 1]} : vector<16x768xf32> to vector<16x384xf32>
    %8 = vector.extract_strided_slice %6 {offsets = [0, 384], sizes = [16, 384], strides = [1, 1]} : vector<16x768xf32> to vector<16x384xf32>
    %9 = arith.negf %7 : vector<16x384xf32>
    %10 = math.exp %9 : vector<16x384xf32>
    %cst_6 = arith.constant 1.000000e+00 : f32
    %11 = vector.broadcast %cst_6 : f32 to vector<16x384xf32>
    %12 = arith.addf %11, %10 : vector<16x384xf32>
    %13 = arith.divf %11, %12 : vector<16x384xf32>
    %14 = arith.mulf %7, %13 : vector<16x384xf32>
    %15 = arith.mulf %14, %8 : vector<16x384xf32>
    %c0_7 = arith.constant 0 : index
    %c0_8 = arith.constant 0 : index
    %16 = vector.load %arg6[%c0_7, %c0_8] : memref<16x128xf32, #tpu.memory_space<vmem>>, vector<16x128xf32>
    %cst_9 = arith.constant dense<0.000000e+00> : vector<16x128xf32>
    %17 = tpu.matmul %15, %5, %cst_9 {dimension_numbers = #tpu.dot_dimension_numbers<[1], [0], [0], [1], [0, 0, 1, 1], [], []>} : vector<16x384xf32>, vector<384x128xf32>, vector<16x128xf32> -> vector<16x128xf32>
    %18 = arith.addf %16, %17 : vector<16x128xf32>
    %c0_10 = arith.constant 0 : index
    %c0_11 = arith.constant 0 : index
    %19 = vector.load %arg6[%c0_10, %c0_11] : memref<16x128xf32, #tpu.memory_space<vmem>>, vector<16x128xf32>
    tpu.vector_store %arg6[%c0_10, %c0_11], %18 {strides = array<i32>} : memref<16x128xf32, #tpu.memory_space<vmem>>, vector<16x128xf32>,
    %c0_i32_12 = arith.constant 0 : i32
    %20 = arith.cmpi eq, %arg1, %c0_i32_12 : i32
    %21 = arith.extui %20 : i1 to i32
    %c0_i32_13 = arith.constant 0 : i32
    %22 = arith.cmpi ne, %21, %c0_i32_13 : i32
    scf.if %22 {
      %c0_14 = arith.constant 0 : index
      %c0_15 = arith.constant 0 : index
      %23 = vector.load %arg6[%c0_14, %c0_15] : memref<16x128xf32, #tpu.memory_space<vmem>>, vector<16x128xf32>
      %c0_16 = arith.constant 0 : index
      %c0_17 = arith.constant 0 : index
      %24 = vector.load %arg5[%c0_16, %c0_17] : memref<16x128xf32, #tpu.memory_space<vmem>>, vector<16x128xf32>
      tpu.vector_store %arg5[%c0_16, %c0_17], %23 {strides = array<i32>} : memref<16x128xf32, #tpu.memory_space<vmem>>, vector<16x128xf32>,
    } else {
    }
    return
  }
  func.func @transform_0(%arg0: i32, %arg1: i32) -> (i32, i32) {
    %c0_i32 = arith.constant 0 : i32
    %c0_i32_0 = arith.constant 0 : i32
    return %arg0, %c0_i32 : i32, i32
  }
  func.func @transform_1(%arg0: i32, %arg1: i32) -> (i32, i32) {
    %c0_i32 = arith.constant 0 : i32
    %c0_i32_0 = arith.constant 0 : i32
    return %c0_i32, %arg1 : i32, i32
  }
  func.func @transform_2(%arg0: i32, %arg1: i32) -> (i32, i32) {
    %c0_i32 = arith.constant 0 : i32
    %c0_i32_0 = arith.constant 0 : i32
    return %arg1, %c0_i32 : i32, i32
  }
  func.func @transform_3(%arg0: i32, %arg1: i32) -> (i32, i32) {
    %c0_i32 = arith.constant 0 : i32
    %c0_i32_0 = arith.constant 0 : i32
    return %arg0, %c0_i32 : i32, i32
  }
}

</mosaic_0001>

<llo_original>
// kernel: tpu_custom_call.1
$region0: #{tpu_custom_call.1}
  #allocation0 [shape = 'u32[]', space=smem, size = 0x4, offset = 0x4, fixed_abs, tag = 'smem constant byte address 0x4 - core index']
  #allocation1 [shape = 'u32[144,128]{1,0:T(1,128)}', space=vmem, size = 0x12000, scoped, tag = 'internal scratch']
  #allocation2 [shape = 'f32[16,128]{1,0:T(8,128)}', space=vmem, size = 0x2000, scoped, tag = 'scratch operand']
  %s0 = inlined_call_operand.hbm [shape: f32[16,128], index: 0, kind: input, shape index: {}]
  %s1 = inlined_call_operand.hbm [shape: f32[128,768], index: 1, kind: input, shape index: {}]
  %s2 = inlined_call_operand.hbm [shape: f32[384,128], index: 2, kind: input, shape index: {}]
  %s3 = inlined_call_operand.hbm [shape: f32[16,128], index: 3, kind: output, shape index: {}]
  %s4 = sld [smem:[#allocation0]]
  $region42: #{tpu_custom_call.1} parent=0
    _
  %s6 = ssub.s32 1, %s4
  %s7 = scalar_select 0, %s6, %s4
  $region1: #{tpu_custom_call.1} parent=0
    #allocation3 [shape = 'u8[8192]{0}', space=vmem, size = 0x2000, scoped, tag = 'input window, operand 0, single buffered']
    #allocation4 [shape = 's32[1]{0}', space=sflag, size = 0x4, scoped, tag = 'scoped memory for tpu_custom_call.1']
    #allocation5 [shape = 's32[1]{0}', space=sflag, size = 0x4, scoped, tag = 'scoped memory for tpu_custom_call.1']
    #allocation6 [shape = 'u8[393216]{0}', space=vmem, size = 0x60000, scoped, tag = 'input window, operand 1, single buffered']
    #allocation7 [shape = 's32[1]{0}', space=sflag, size = 0x4, scoped, tag = 'scoped memory for tpu_custom_call.1']
    #allocation8 [shape = 'u8[196608]{0}', space=vmem, size = 0x30000, scoped, tag = 'input window, operand 2, single buffered']
    #allocation9 [shape = 'u8[8192]{0}', space=vmem, size = 0x2000, scoped, tag = 'output window, operand 0, single buffered']
    %8 = vsyncpa [#allocation4], 0
    %9 = vsyncpa [#allocation7], 0
    %10 = vsyncpa [#allocation5], 0
    // Predicated region
    $region2: #{tpu_custom_call.1} parent=1 // pred_check
      _
    $region3: #{tpu_custom_call.1} parent=1 // pred_check_branch
      %12 = sbr.rel (0) target = $region5
    $region4: #{tpu_custom_call.1} parent=1 // pred_region
      %s14 = ssub.s32 256, 256
      %15 = vsyncadd [#allocation4], %s14
      %s16 = sshll.u32 [#allocation3], 4
      %s17 = int_to_ptr.vmem [resolvable:$true] %s16
      %22 = dma.hbm_to_vmem [thread:$0]  %s0, 256, %s17, [#allocation4], 128, 128, 8
    $region5: #{tpu_custom_call.1} parent=1 // pred_fallthru
      _
    // Predicated region
    $region6: #{tpu_custom_call.1} parent=1 // pred_check
      _
    $region7: #{tpu_custom_call.1} parent=1 // pred_check_branch
      %24 = sbr.rel (0) target = $region9
    $region8: #{tpu_custom_call.1} parent=1 // pred_region
      %s26 = ssub.s32 12288, 12288
      %27 = vsyncadd [#allocation7], %s26
      %s28 = sshll.u32 [#allocation6], 4
      %s29 = int_to_ptr.vmem [resolvable:$true] %s28
      %34 = dma.hbm_to_vmem [thread:$0]  %s1, 12288, %s29, [#allocation7], 768, 768, 48
    $region9: #{tpu_custom_call.1} parent=1 // pred_fallthru
      _
    // Predicated region
    $region10: #{tpu_custom_call.1} parent=1 // pred_check
      _
    $region11: #{tpu_custom_call.1} parent=1 // pred_check_branch
      %36 = sbr.rel (0) target = $region13
    $region12: #{tpu_custom_call.1} parent=1 // pred_region
      %s38 = ssub.s32 6144, 6144
      %39 = vsyncadd [#allocation7], %s38
      %s40 = sshll.u32 [#allocation8], 4
      %s41 = int_to_ptr.vmem [resolvable:$true] %s40
      %46 = dma.hbm_to_vmem [thread:$0]  %s2, 6144, %s41, [#allocation7], 128, 128, 8
    $region13: #{tpu_custom_call.1} parent=1 // pred_fallthru
      _
    // Predicated region
    $region14: #{tpu_custom_call.1} parent=1 // pred_check
      _
    $region15: #{tpu_custom_call.1} parent=1 // pred_check_branch
      %48 = sbr.rel (0) target = $region17
    $region16: #{tpu_custom_call.1} parent=1 // pred_region
      %49 = dma.done [#allocation4], 256
    $region17: #{tpu_custom_call.1} parent=1 // pred_fallthru
      _
    // Predicated region
    $region18: #{tpu_custom_call.1} parent=1 // pred_check
      _
    $region19: #{tpu_custom_call.1} parent=1 // pred_check_branch
      %51 = sbr.rel (0) target = $region21
    $region20: #{tpu_custom_call.1} parent=1 // pred_region
      %52 = dma.done [#allocation7], 12288
    $region21: #{tpu_custom_call.1} parent=1 // pred_fallthru
      _
    // Predicated region
    $region22: #{tpu_custom_call.1} parent=1 // pred_check
      _
    $region23: #{tpu_custom_call.1} parent=1 // pred_check_branch
      %54 = sbr.rel (0) target = $region25
    $region24: #{tpu_custom_call.1} parent=1 // pred_region
      %55 = dma.done [#allocation7], 6144
    $region25: #{tpu_custom_call.1} parent=1 // pred_fallthru
      _
    %p56 = scmp.eq.s32.totalorder 0, 0
    // Predicated region
    $region26: #{tpu_custom_call.1} parent=1 // pred_check
      %p57 = pneg %p56
    $region27: #{tpu_custom_call.1} parent=1 // pred_check_branch
      %59 = sbr.rel (%p57) target = $region29
    $region28: #{tpu_custom_call.1} parent=1 // pred_region
      %60 = vst [vmem:[#allocation2] sm:$0xff] 0.0
      %61 = vst [vmem:[#allocation2 + $0x8] sm:$0xff] 0.0
    $region29: #{tpu_custom_call.1} parent=1 // pred_fallthru
      _
    %v62 = vld [vmem:[#allocation3] sm:$0xff]
    %v63 = vld [vmem:[#allocation3 + $0x8] sm:$0xff]
    %v64 = vld [vmem:[#allocation6] sm:$0xff]
    %v65 = vld [vmem:[#allocation6 + $0x8] sm:$0xff]
    %v66 = vld [vmem:[#allocation6 + $0x10] sm:$0xff]
    %v67 = vld [vmem:[#allocation6 + $0x18] sm:$0xff]
    %v68 = vld [vmem:[#allocation6 + $0x20] sm:$0xff]
    %v69 = vld [vmem:[#allocation6 + $0x28] sm:$0xff]
    %v70 = vld [vmem:[#allocation6 + $0x30] sm:$0xff]
    %v71 = vld [vmem:[#allocation6 + $0x38] sm:$0xff]
    %v72 = vld [vmem:[#allocation6 + $0x40] sm:$0xff]
    %v73 = vld [vmem:[#allocation6 + $0x48] sm:$0xff]
    %v74 = vld [vmem:[#allocation6 + $0x50] sm:$0xff]
    %v75 = vld [vmem:[#allocation6 + $0x58] sm:$0xff]
    %v76 = vld [vmem:[#allocation6 + $0x60] sm:$0xff]
    %v77 = vld [vmem:[#allocation6 + $0x68] sm:$0xff]
    %v78 = vld [vmem:[#allocation6 + $0x70] sm:$0xff]
    %v79 = vld [vmem:[#allocation6 + $0x78] sm:$0xff]
    %v80 = vld [vmem:[#allocation6 + $0x80] sm:$0xff]
    %v81 = vld [vmem:[#allocation6 + $0x88] sm:$0xff]
    %v82 = vld [vmem:[#allocation6 + $0x90] sm:$0xff]
    %v83 = vld [vmem:[#allocation6 + $0x98] sm:$0xff]
    %v84 = vld [vmem:[#allocation6 + $0xa0] sm:$0xff]
    %v85 = vld [vmem:[#allocation6 + $0xa8] sm:$0xff]
    %v86 = vld [vmem:[#allocation6 + $0xb0] sm:$0xff]
    %v87 = vld [vmem:[#allocation6 + $0xb8] sm:$0xff]
    %v88 = vld [vmem:[#allocation6 + $0xc0] sm:$0xff]
    %v89 = vld [vmem:[#allocation6 + $0xc8] sm:$0xff]
    %v90 = vld [vmem:[#allocation6 + $0xd0] sm:$0xff]
    %v91 = vld [vmem:[#allocation6 + $0xd8] sm:$0xff]
    %v92 = vld [vmem:[#allocation6 + $0xe0] sm:$0xff]
    %v93 = vld [vmem:[#allocation6 + $0xe8] sm:$0xff]
    %v94 = vld [vmem:[#allocation6 + $0xf0] sm:$0xff]
    %v95 = vld [vmem:[#allocation6 + $0xf8] sm:$0xff]
    %v96 = vld [vmem:[#allocation6 + $0x100] sm:$0xff]
    %v97 = vld [vmem:[#allocation6 + $0x108] sm:$0xff]
    %v98 = vld [vmem:[#allocation6 + $0x110] sm:$0xff]
    %v99 = vld [vmem:[#allocation6 + $0x118] sm:$0xff]
    %v100 = vld [vmem:[#allocation6 + $0x120] sm:$0xff]
    %v101 = vld [vmem:[#allocation6 + $0x128] sm:$0xff]
    %v102 = vld [vmem:[#allocation6 + $0x130] sm:$0xff]
    %v103 = vld [vmem:[#allocation6 + $0x138] sm:$0xff]
    %v104 = vld [vmem:[#allocation6 + $0x140] sm:$0xff]
    %v105 = vld [vmem:[#allocation6 + $0x148] sm:$0xff]
    %v106 = vld [vmem:[#allocation6 + $0x150] sm:$0xff]
    %v107 = vld [vmem:[#allocation6 + $0x158] sm:$0xff]
    %v108 = vld [vmem:[#allocation6 + $0x160] sm:$0xff]
    %v109 = vld [vmem:[#allocation6 + $0x168] sm:$0xff]
    %v110 = vld [vmem:[#allocation6 + $0x170] sm:$0xff]
    %v111 = vld [vmem:[#allocation6 + $0x178] sm:$0xff]
    %v112 = vld [vmem:[#allocation6 + $0x180] sm:$0xff]
    %v113 = vld [vmem:[#allocation6 + $0x188] sm:$0xff]
    %v114 = vld [vmem:[#allocation6 + $0x190] sm:$0xff]
    %v115 = vld [vmem:[#allocation6 + $0x198] sm:$0xff]
    %v116 = vld [vmem:[#allocation6 + $0x1a0] sm:$0xff]
    %v117 = vld [vmem:[#allocation6 + $0x1a8] sm:$0xff]
    %v118 = vld [vmem:[#allocation6 + $0x1b0] sm:$0xff]
    %v119 = vld [vmem:[#allocation6 + $0x1b8] sm:$0xff]
    %v120 = vld [vmem:[#allocation6 + $0x1c0] sm:$0xff]
    %v121 = vld [vmem:[#allocation6 + $0x1c8] sm:$0xff]
    %v122 = vld [vmem:[#allocation6 + $0x1d0] sm:$0xff]
    %v123 = vld [vmem:[#allocation6 + $0x1d8] sm:$0xff]
    %v124 = vld [vmem:[#allocation6 + $0x1e0] sm:$0xff]
    %v125 = vld [vmem:[#allocation6 + $0x1e8] sm:$0xff]
    %v126 = vld [vmem:[#allocation6 + $0x1f0] sm:$0xff]
    %v127 = vld [vmem:[#allocation6 + $0x1f8] sm:$0xff]
    %v128 = vld [vmem:[#allocation6 + $0x200] sm:$0xff]
    %v129 = vld [vmem:[#allocation6 + $0x208] sm:$0xff]
    %v130 = vld [vmem:[#allocation6 + $0x210] sm:$0xff]
    %v131 = vld [vmem:[#allocation6 + $0x218] sm:$0xff]
    %v132 = vld [vmem:[#allocation6 + $0x220] sm:$0xff]
    %v133 = vld [vmem:[#allocation6 + $0x228] sm:$0xff]
    %v134 = vld [vmem:[#allocation6 + $0x230] sm:$0xff]
    %v135 = vld [vmem:[#allocation6 + $0x238] sm:$0xff]
    %v136 = vld [vmem:[#allocation6 + $0x240] sm:$0xff]
    %v137 = vld [vmem:[#allocation6 + $0x248] sm:$0xff]
    %v138 = vld [vmem:[#allocation6 + $0x250] sm:$0xff]
    %v139 = vld [vmem:[#allocation6 + $0x258] sm:$0xff]
    %v140 = vld [vmem:[#allocation6 + $0x260] sm:$0xff]
    %v141 = vld [vmem:[#allocation6 + $0x268] sm:$0xff]
    %v142 = vld [vmem:[#allocation6 + $0x270] sm:$0xff]
    %v143 = vld [vmem:[#allocation6 + $0x278] sm:$0xff]
    %v144 = vld [vmem:[#allocation6 + $0x280] sm:$0xff]
    %v145 = vld [vmem:[#allocation6 + $0x288] sm:$0xff]
    %v146 = vld [vmem:[#allocation6 + $0x290] sm:$0xff]
    %v147 = vld [vmem:[#allocation6 + $0x298] sm:$0xff]
    %v148 = vld [vmem:[#allocation6 + $0x2a0] sm:$0xff]
    %v149 = vld [vmem:[#allocation6 + $0x2a8] sm:$0xff]
    %v150 = vld [vmem:[#allocation6 + $0x2b0] sm:$0xff]
    %v151 = vld [vmem:[#allocation6 + $0x2b8] sm:$0xff]
    %v152 = vld [vmem:[#allocation6 + $0x2c0] sm:$0xff]
    %v153 = vld [vmem:[#allocation6 + $0x2c8] sm:$0xff]
    %v154 = vld [vmem:[#allocation6 + $0x2d0] sm:$0xff]
    %v155 = vld [vmem:[#allocation6 + $0x2d8] sm:$0xff]
    %v156 = vld [vmem:[#allocation6 + $0x2e0] sm:$0xff]
    %v157 = vld [vmem:[#allocation6 + $0x2e8] sm:$0xff]
    %v158 = vld [vmem:[#allocation6 + $0x2f0] sm:$0xff]
    %v159 = vld [vmem:[#allocation6 + $0x2f8] sm:$0xff]
    %v160 = vld [vmem:[#allocation8] sm:$0xff]
    %v161 = vld [vmem:[#allocation8 + $0x8] sm:$0xff]
    %v162 = vld [vmem:[#allocation8 + $0x10] sm:$0xff]
    %v163 = vld [vmem:[#allocation8 + $0x18] sm:$0xff]
    %v164 = vld [vmem:[#allocation8 + $0x20] sm:$0xff]
    %v165 = vld [vmem:[#allocation8 + $0x28] sm:$0xff]
    %v166 = vld [vmem:[#allocation8 + $0x30] sm:$0xff]
    %v167 = vld [vmem:[#allocation8 + $0x38] sm:$0xff]
    %v168 = vld [vmem:[#allocation8 + $0x40] sm:$0xff]
    %v169 = vld [vmem:[#allocation8 + $0x48] sm:$0xff]
    %v170 = vld [vmem:[#allocation8 + $0x50] sm:$0xff]
    %v171 = vld [vmem:[#allocation8 + $0x58] sm:$0xff]
    %v172 = vld [vmem:[#allocation8 + $0x60] sm:$0xff]
    %v173 = vld [vmem:[#allocation8 + $0x68] sm:$0xff]
    %v174 = vld [vmem:[#allocation8 + $0x70] sm:$0xff]
    %v175 = vld [vmem:[#allocation8 + $0x78] sm:$0xff]
    %v176 = vld [vmem:[#allocation8 + $0x80] sm:$0xff]
    %v177 = vld [vmem:[#allocation8 + $0x88] sm:$0xff]
    %v178 = vld [vmem:[#allocation8 + $0x90] sm:$0xff]
    %v179 = vld [vmem:[#allocation8 + $0x98] sm:$0xff]
    %v180 = vld [vmem:[#allocation8 + $0xa0] sm:$0xff]
    %v181 = vld [vmem:[#allocation8 + $0xa8] sm:$0xff]
    %v182 = vld [vmem:[#allocation8 + $0xb0] sm:$0xff]
    %v183 = vld [vmem:[#allocation8 + $0xb8] sm:$0xff]
    %v184 = vld [vmem:[#allocation8 + $0xc0] sm:$0xff]
    %v185 = vld [vmem:[#allocation8 + $0xc8] sm:$0xff]
    %v186 = vld [vmem:[#allocation8 + $0xd0] sm:$0xff]
    %v187 = vld [vmem:[#allocation8 + $0xd8] sm:$0xff]
    %v188 = vld [vmem:[#allocation8 + $0xe0] sm:$0xff]
    %v189 = vld [vmem:[#allocation8 + $0xe8] sm:$0xff]
    %v190 = vld [vmem:[#allocation8 + $0xf0] sm:$0xff]
    %v191 = vld [vmem:[#allocation8 + $0xf8] sm:$0xff]
    %v192 = vld [vmem:[#allocation8 + $0x100] sm:$0xff]
    %v193 = vld [vmem:[#allocation8 + $0x108] sm:$0xff]
    %v194 = vld [vmem:[#allocation8 + $0x110] sm:$0xff]
    %v195 = vld [vmem:[#allocation8 + $0x118] sm:$0xff]
    %v196 = vld [vmem:[#allocation8 + $0x120] sm:$0xff]
    %v197 = vld [vmem:[#allocation8 + $0x128] sm:$0xff]
    %v198 = vld [vmem:[#allocation8 + $0x130] sm:$0xff]
    %v199 = vld [vmem:[#allocation8 + $0x138] sm:$0xff]
    %v200 = vld [vmem:[#allocation8 + $0x140] sm:$0xff]
    %v201 = vld [vmem:[#allocation8 + $0x148] sm:$0xff]
    %v202 = vld [vmem:[#allocation8 + $0x150] sm:$0xff]
    %v203 = vld [vmem:[#allocation8 + $0x158] sm:$0xff]
    %v204 = vld [vmem:[#allocation8 + $0x160] sm:$0xff]
    %v205 = vld [vmem:[#allocation8 + $0x168] sm:$0xff]
    %v206 = vld [vmem:[#allocation8 + $0x170] sm:$0xff]
    %v207 = vld [vmem:[#allocation8 + $0x178] sm:$0xff]
    %208 = vmatprep.subr.mxu0 %v65
    %209 = vmatpush1.msra.mxu0 %v64
    %210 = vmatprep.subr.mxu0 %v71
    %211 = vmatpush1.msra.mxu0 %v70
    %212 = vmatprep.subr.mxu0 %v77
    %213 = vmatpush1.msra.mxu0 %v76
    %214 = vmatprep.subr.mxu0 %v83
    %215 = vmatpush1.msra.mxu0 %v82
    %216 = vmatprep.subr.mxu0 %v89
    %217 = vmatpush1.msra.mxu0 %v88
    %218 = vmatprep.subr.mxu0 %v95
    %219 = vmatpush1.msra.mxu0 %v94
    %220 = vmatprep.subr.mxu0 %v101
    %221 = vmatpush1.msra.mxu0 %v100
    %222 = vmatprep.subr.mxu0 %v107
    %223 = vmatpush1.msra.mxu0 %v106
    %224 = vmatprep.subr.mxu0 %v113
    %225 = vmatpush1.msra.mxu0 %v112
    %226 = vmatprep.subr.mxu0 %v119
    %227 = vmatpush1.msra.mxu0 %v118
    %228 = vmatprep.subr.mxu0 %v125
    %229 = vmatpush1.msra.mxu0 %v124
    %230 = vmatprep.subr.mxu0 %v131
    %231 = vmatpush1.msra.mxu0 %v130
    %232 = vmatprep.subr.mxu0 %v137
    %233 = vmatpush1.msra.mxu0 %v136
    %234 = vmatprep.subr.mxu0 %v143
    %235 = vmatpush1.msra.mxu0 %v142
    %236 = vmatprep.subr.mxu0 %v149
    %237 = vmatpush1.msra.mxu0 %v148
    %238 = vmatprep.subr.mxu0 %v155
    %239 = vmatpush1.msra.mxu0 %v154
    %240 = vmatprep.subr.mxu0 0.0
    %241 = vmatpush1.msra.mxu0 0.0
    %242 = vmatprep.subr.mxu0 0.0
    %243 = vmatpush1.msra.mxu0 0.0
    %244 = vmatprep.subr.mxu0 0.0
    %245 = vmatpush1.msra.mxu0 0.0
    %246 = vmatprep.subr.mxu0 0.0
    %247 = vmatpush1.msra.mxu0 0.0
    %248 = vmatprep.subr.mxu0 0.0
    %249 = vmatpush1.msra.mxu0 0.0
    %250 = vmatprep.subr.mxu0 0.0
    %251 = vmatpush1.msra.mxu0 0.0
    %252 = vmatprep.subr.mxu0 0.0
    %253 = vmatpush1.msra.mxu0 0.0
    %254 = vmatprep.subr.mxu0 0.0
    %255 = vmatpush1.msra.mxu0 0.0
    %256 = vmatprep.subr.mxu0 0.0
    %257 = vmatpush1.msra.mxu0 0.0
    %258 = vmatprep.subr.mxu0 0.0
    %259 = vmatpush1.msra.mxu0 0.0
    %260 = vmatprep.subr.mxu0 0.0
    %261 = vmatpush1.msra.mxu0 0.0
    %262 = vmatprep.subr.mxu0 0.0
    %263 = vmatpush1.msra.mxu0 0.0
    %264 = vmatprep.subr.mxu0 0.0
    %265 = vmatpush1.msra.mxu0 0.0
    %266 = vmatprep.subr.mxu0 0.0
    %267 = vmatpush1.msra.mxu0 0.0
    %268 = vmatprep.subr.mxu0 0.0
    %269 = vmatpush1.msra.mxu0 0.0
    %270 = vmatprep.subr.mxu0 0.0
    %271 = vmatpush1.msra.mxu0 0.0
    %272 = vmatprep.mubr.f32.mxu0 0.0
    %273 = vmatmul.mubr.f32.gmra.mrb[0].mxu0 %v62
    %v274 = vpop.f32.mrb[0].mxu0
    %v275 = vadd.f32 0.0, %v274
    %v276 = vpop.f32.mrb[0].mxu0
    %v277 = vadd.f32 0.0, %v276
    %278 = vmatprep.mubr.f32.mxu0 0.0
    %279 = vmatmul.mubr.f32.gmra.mrb[0].mxu0 %v63
    %v280 = vpop.f32.mrb[0].mxu0
    %v281 = vadd.f32 0.0, %v280
    %v282 = vpop.f32.mrb[0].mxu0
    %v283 = vadd.f32 0.0, %v282
    %284 = vdwg.mxu0
    %285 = vmatprep.subr.mxu0 %v67
    %286 = vmatpush1.msra.mxu0 %v66
    %287 = vmatprep.subr.mxu0 %v73
    %288 = vmatpush1.msra.mxu0 %v72
    %289 = vmatprep.subr.mxu0 %v79
    %290 = vmatpush1.msra.mxu0 %v78
    %291 = vmatprep.subr.mxu0 %v85
    %292 = vmatpush1.msra.mxu0 %v84
    %293 = vmatprep.subr.mxu0 %v91
    %294 = vmatpush1.msra.mxu0 %v90
    %295 = vmatprep.subr.mxu0 %v97
    %296 = vmatpush1.msra.mxu0 %v96
    %297 = vmatprep.subr.mxu0 %v103
    %298 = vmatpush1.msra.mxu0 %v102
    %299 = vmatprep.subr.mxu0 %v109
    %300 = vmatpush1.msra.mxu0 %v108
    %301 = vmatprep.subr.mxu0 %v115
    %302 = vmatpush1.msra.mxu0 %v114
    %303 = vmatprep.subr.mxu0 %v121
    %304 = vmatpush1.msra.mxu0 %v120
    %305 = vmatprep.subr.mxu0 %v127
    %306 = vmatpush1.msra.mxu0 %v126
    %307 = vmatprep.subr.mxu0 %v133
    %308 = vmatpush1.msra.mxu0 %v132
    %309 = vmatprep.subr.mxu0 %v139
    %310 = vmatpush1.msra.mxu0 %v138
    %311 = vmatprep.subr.mxu0 %v145
    %312 = vmatpush1.msra.mxu0 %v144
    %313 = vmatprep.subr.mxu0 %v151
    %314 = vmatpush1.msra.mxu0 %v150
    %315 = vmatprep.subr.mxu0 %v157
    %316 = vmatpush1.msra.mxu0 %v156
    %317 = vmatprep.subr.mxu0 0.0
    %318 = vmatpush1.msra.mxu0 0.0
    %319 = vmatprep.subr.mxu0 0.0
    %320 = vmatpush1.msra.mxu0 0.0
    %321 = vmatprep.subr.mxu0 0.0
    %322 = vmatpush1.msra.mxu0 0.0
    %323 = vmatprep.subr.mxu0 0.0
    %324 = vmatpush1.msra.mxu0 0.0
    %325 = vmatprep.subr.mxu0 0.0
    %326 = vmatpush1.msra.mxu0 0.0
    %327 = vmatprep.subr.mxu0 0.0
    %328 = vmatpush1.msra.mxu0 0.0
    %329 = vmatprep.subr.mxu0 0.0
    %330 = vmatpush1.msra.mxu0 0.0
    %331 = vmatprep.subr.mxu0 0.0
    %332 = vmatpush1.msra.mxu0 0.0
    %333 = vmatprep.subr.mxu0 0.0
    %334 = vmatpush1.msra.mxu0 0.0
    %335 = vmatprep.subr.mxu0 0.0
    %336 = vmatpush1.msra.mxu0 0.0
    %337 = vmatprep.subr.mxu0 0.0
    %338 = vmatpush1.msra.mxu0 0.0
    %339 = vmatprep.subr.mxu0 0.0
    %340 = vmatpush1.msra.mxu0 0.0
    %341 = vmatprep.subr.mxu0 0.0
    %342 = vmatpush1.msra.mxu0 0.0
    %343 = vmatprep.subr.mxu0 0.0
    %344 = vmatpush1.msra.mxu0 0.0
    %345 = vmatprep.subr.mxu0 0.0
    %346 = vmatpush1.msra.mxu0 0.0
    %347 = vmatprep.subr.mxu0 0.0
    %348 = vmatpush1.msra.mxu0 0.0
    %349 = vmatprep.mubr.f32.mxu0 0.0
    %350 = vmatmul.mubr.f32.gmra.mrb[0].mxu0 %v62
    %v351 = vpop.f32.mrb[0].mxu0
    %v352 = vadd.f32 0.0, %v351
    %v353 = vpop.f32.mrb[0].mxu0
    %v354 = vadd.f32 0.0, %v353
    %355 = vmatprep.mubr.f32.mxu0 0.0
    %356 = vmatmul.mubr.f32.gmra.mrb[0].mxu0 %v63
    %v357 = vpop.f32.mrb[0].mxu0
    %v358 = vadd.f32 0.0, %v357
    %v359 = vpop.f32.mrb[0].mxu0
    %v360 = vadd.f32 0.0, %v359
    %361 = vdwg.mxu0
    %362 = vmatprep.subr.mxu0 %v69
    %363 = vmatpush1.msra.mxu0 %v68
    %364 = vmatprep.subr.mxu0 %v75
    %365 = vmatpush1.msra.mxu0 %v74
    %366 = vmatprep.subr.mxu0 %v81
    %367 = vmatpush1.msra.mxu0 %v80
    %368 = vmatprep.subr.mxu0 %v87
    %369 = vmatpush1.msra.mxu0 %v86
    %370 = vmatprep.subr.mxu0 %v93
    %371 = vmatpush1.msra.mxu0 %v92
    %372 = vmatprep.subr.mxu0 %v99
    %373 = vmatpush1.msra.mxu0 %v98
    %374 = vmatprep.subr.mxu0 %v105
    %375 = vmatpush1.msra.mxu0 %v104
    %376 = vmatprep.subr.mxu0 %v111
    %377 = vmatpush1.msra.mxu0 %v110
    %378 = vmatprep.subr.mxu0 %v117
    %379 = vmatpush1.msra.mxu0 %v116
    %380 = vmatprep.subr.mxu0 %v123
    %381 = vmatpush1.msra.mxu0 %v122
    %382 = vmatprep.subr.mxu0 %v129
    %383 = vmatpush1.msra.mxu0 %v128
    %384 = vmatprep.subr.mxu0 %v135
    %385 = vmatpush1.msra.mxu0 %v134
    %386 = vmatprep.subr.mxu0 %v141
    %387 = vmatpush1.msra.mxu0 %v140
    %388 = vmatprep.subr.mxu0 %v147
    %389 = vmatpush1.msra.mxu0 %v146
    %390 = vmatprep.subr.mxu0 %v153
    %391 = vmatpush1.msra.mxu0 %v152
    %392 = vmatprep.subr.mxu0 %v159
    %393 = vmatpush1.msra.mxu0 %v158
    %394 = vmatprep.subr.mxu0 0.0
    %395 = vmatpush1.msra.mxu0 0.0
    %396 = vmatprep.subr.mxu0 0.0
    %397 = vmatpush1.msra.mxu0 0.0
    %398 = vmatprep.subr.mxu0 0.0
    %399 = vmatpush1.msra.mxu0 0.0
    %400 = vmatprep.subr.mxu0 0.0
    %401 = vmatpush1.msra.mxu0 0.0
    %402 = vmatprep.subr.mxu0 0.0
    %403 = vmatpush1.msra.mxu0 0.0
    %404 = vmatprep.subr.mxu0 0.0
    %405 = vmatpush1.msra.mxu0 0.0
    %406 = vmatprep.subr.mxu0 0.0
    %407 = vmatpush1.msra.mxu0 0.0
    %408 = vmatprep.subr.mxu0 0.0
    %409 = vmatpush1.msra.mxu0 0.0
    %410 = vmatprep.subr.mxu0 0.0
    %411 = vmatpush1.msra.mxu0 0.0
    %412 = vmatprep.subr.mxu0 0.0
    %413 = vmatpush1.msra.mxu0 0.0
    %414 = vmatprep.subr.mxu0 0.0
    %415 = vmatpush1.msra.mxu0 0.0
    %416 = vmatprep.subr.mxu0 0.0
    %417 = vmatpush1.msra.mxu0 0.0
    %418 = vmatprep.subr.mxu0 0.0
    %419 = vmatpush1.msra.mxu0 0.0
    %420 = vmatprep.subr.mxu0 0.0
    %421 = vmatpush1.msra.mxu0 0.0
    %422 = vmatprep.subr.mxu0 0.0
    %423 = vmatpush1.msra.mxu0 0.0
    %424 = vmatprep.subr.mxu0 0.0
    %425 = vmatpush1.msra.mxu0 0.0
    %426 = vmatprep.mubr.f32.mxu0 0.0
    %427 = vmatmul.mubr.f32.gmra.mrb[0].mxu0 %v62
    %v428 = vpop.f32.mrb[0].mxu0
    %v429 = vadd.f32 0.0, %v428
    %v430 = vpop.f32.mrb[0].mxu0
    %v431 = vadd.f32 0.0, %v430
    %432 = vmatprep.mubr.f32.mxu0 0.0
    %433 = vmatmul.mubr.f32.gmra.mrb[0].mxu0 %v63
    %v434 = vpop.f32.mrb[0].mxu0
    %v435 = vadd.f32 0.0, %v434
    %v436 = vpop.f32.mrb[0].mxu0
    %v437 = vadd.f32 0.0, %v436
    %438 = vdwg.mxu0
    %v439 = vxor.u32 %v275, 2147483648
    %v440 = vxor.u32 %v277, 2147483648
    %v441 = vxor.u32 %v352, 2147483648
    %v442 = vxor.u32 %v281, 2147483648
    %v443 = vxor.u32 %v283, 2147483648
    %v444 = vxor.u32 %v358, 2147483648
    %v445 = vmul.f32 %v439, 1.442695
    %v446 = vpow.pop %v445
    %v447 = vmul.f32 %v440, 1.442695
    %v448 = vpow.pop %v447
    %v449 = vmul.f32 %v441, 1.442695
    %v450 = vpow.pop %v449
    %v451 = vmul.f32 %v442, 1.442695
    %v452 = vpow.pop %v451
    %v453 = vmul.f32 %v443, 1.442695
    %v454 = vpow.pop %v453
    %v455 = vmul.f32 %v444, 1.442695
    %v456 = vpow.pop %v455
    %v457 = vadd.f32 %v446, 1.0
    %v458 = vadd.f32 %v448, 1.0
    %v459 = vadd.f32 %v450, 1.0
    %v460 = vadd.f32 %v452, 1.0
    %v461 = vadd.f32 %v454, 1.0
    %v462 = vadd.f32 %v456, 1.0
    %v463 = vrcp.pop %v457
    %v464 = vmul.f32 1.0, %v463
    %v465 = vrcp.pop %v458
    %v466 = vmul.f32 1.0, %v465
    %v467 = vrcp.pop %v459
    %v468 = vmul.f32 1.0, %v467
    %v469 = vrcp.pop %v460
    %v470 = vmul.f32 1.0, %v469
    %v471 = vrcp.pop %v461
    %v472 = vmul.f32 1.0, %v471
    %v473 = vrcp.pop %v462
    %v474 = vmul.f32 1.0, %v473
    %v475 = vmul.f32 %v275, %v464
    %v476 = vmul.f32 %v277, %v466
    %v477 = vmul.f32 %v352, %v468
    %v478 = vmul.f32 %v281, %v470
    %v479 = vmul.f32 %v283, %v472
    %v480 = vmul.f32 %v358, %v474
    %v481 = vmul.f32 %v475, %v354
    %v482 = vmul.f32 %v476, %v429
    %v483 = vmul.f32 %v477, %v431
    %v484 = vmul.f32 %v478, %v360
    %v485 = vmul.f32 %v479, %v435
    %v486 = vmul.f32 %v480, %v437
    %v487 = vld [vmem:[#allocation2] sm:$0xff]
    %v488 = vld [vmem:[#allocation2 + $0x8] sm:$0xff]
    %489 = vmatprep.subr.mxu0 0.0
    %490 = vmatpush1.msra.mxu0 %v160
    %491 = vmatprep.subr.mxu0 0.0
    %492 = vmatpush1.msra.mxu0 %v161
    %493 = vmatprep.subr.mxu0 0.0
    %494 = vmatpush1.msra.mxu0 %v162
    %495 = vmatprep.subr.mxu0 0.0
    %496 = vmatpush1.msra.mxu0 %v163
    %497 = vmatprep.subr.mxu0 0.0
    %498 = vmatpush1.msra.mxu0 %v164
    %499 = vmatprep.subr.mxu0 0.0
    %500 = vmatpush1.msra.mxu0 %v165
    %501 = vmatprep.subr.mxu0 0.0
    %502 = vmatpush1.msra.mxu0 %v166
    %503 = vmatprep.subr.mxu0 0.0
    %504 = vmatpush1.msra.mxu0 %v167
    %505 = vmatprep.subr.mxu0 0.0
    %506 = vmatpush1.msra.mxu0 %v168
    %507 = vmatprep.subr.mxu0 0.0
    %508 = vmatpush1.msra.mxu0 %v169
    %509 = vmatprep.subr.mxu0 0.0
    %510 = vmatpush1.msra.mxu0 %v170
    %511 = vmatprep.subr.mxu0 0.0
    %512 = vmatpush1.msra.mxu0 %v171
    %513 = vmatprep.subr.mxu0 0.0
    %514 = vmatpush1.msra.mxu0 %v172
    %515 = vmatprep.subr.mxu0 0.0
    %516 = vmatpush1.msra.mxu0 %v173
    %517 = vmatprep.subr.mxu0 0.0
    %518 = vmatpush1.msra.mxu0 %v174
    %519 = vmatprep.subr.mxu0 0.0
    %520 = vmatpush1.msra.mxu0 %v175
    %521 = vmatprep.subr.mxu0 0.0
    %522 = vmatpush1.msra.mxu0 %v176
    %523 = vmatprep.subr.mxu0 0.0
    %524 = vmatpush1.msra.mxu0 %v177
    %525 = vmatprep.subr.mxu0 0.0
    %526 = vmatpush1.msra.mxu0 %v178
    %527 = vmatprep.subr.mxu0 0.0
    %528 = vmatpush1.msra.mxu0 %v179
    %529 = vmatprep.subr.mxu0 0.0
    %530 = vmatpush1.msra.mxu0 %v180
    %531 = vmatprep.subr.mxu0 0.0
    %532 = vmatpush1.msra.mxu0 %v181
    %533 = vmatprep.subr.mxu0 0.0
    %534 = vmatpush1.msra.mxu0 %v182
    %535 = vmatprep.subr.mxu0 0.0
    %536 = vmatpush1.msra.mxu0 %v183
    %537 = vmatprep.subr.mxu0 0.0
    %538 = vmatpush1.msra.mxu0 %v184
    %539 = vmatprep.subr.mxu0 0.0
    %540 = vmatpush1.msra.mxu0 %v185
    %541 = vmatprep.subr.mxu0 0.0
    %542 = vmatpush1.msra.mxu0 %v186
    %543 = vmatprep.subr.mxu0 0.0
    %544 = vmatpush1.msra.mxu0 %v187
    %545 = vmatprep.subr.mxu0 0.0
    %546 = vmatpush1.msra.mxu0 %v188
    %547 = vmatprep.subr.mxu0 0.0
    %548 = vmatpush1.msra.mxu0 %v189
    %549 = vmatprep.subr.mxu0 0.0
    %550 = vmatpush1.msra.mxu0 %v190
    %551 = vmatprep.subr.mxu0 0.0
    %552 = vmatpush1.msra.mxu0 %v191
    %553 = vmatprep.mubr.f32.mxu0 %v482
    %554 = vmatmul.mubr.f32.gmra.mrb[0].mxu0 %v481
    %v555 = vpop.f32.mrb[0].mxu0
    %v556 = vadd.f32 0.0, %v555
    %v557 = vpop.f32.mrb[0].mxu0
    %558 = vmatprep.mubr.f32.mxu0 %v485
    %559 = vmatmul.mubr.f32.gmra.mrb[0].mxu0 %v484
    %v560 = vpop.f32.mrb[0].mxu0
    %v561 = vadd.f32 0.0, %v560
    %v562 = vpop.f32.mrb[0].mxu0
    %563 = vdwg.mxu0
    %564 = vmatprep.subr.mxu0 0.0
    %565 = vmatpush1.msra.mxu0 %v192
    %566 = vmatprep.subr.mxu0 0.0
    %567 = vmatpush1.msra.mxu0 %v193
    %568 = vmatprep.subr.mxu0 0.0
    %569 = vmatpush1.msra.mxu0 %v194
    %570 = vmatprep.subr.mxu0 0.0
    %571 = vmatpush1.msra.mxu0 %v195
    %572 = vmatprep.subr.mxu0 0.0
    %573 = vmatpush1.msra.mxu0 %v196
    %574 = vmatprep.subr.mxu0 0.0
    %575 = vmatpush1.msra.mxu0 %v197
    %576 = vmatprep.subr.mxu0 0.0
    %577 = vmatpush1.msra.mxu0 %v198
    %578 = vmatprep.subr.mxu0 0.0
    %579 = vmatpush1.msra.mxu0 %v199
    %580 = vmatprep.subr.mxu0 0.0
    %581 = vmatpush1.msra.mxu0 %v200
    %582 = vmatprep.subr.mxu0 0.0
    %583 = vmatpush1.msra.mxu0 %v201
    %584 = vmatprep.subr.mxu0 0.0
    %585 = vmatpush1.msra.mxu0 %v202
    %586 = vmatprep.subr.mxu0 0.0
    %587 = vmatpush1.msra.mxu0 %v203
    %588 = vmatprep.subr.mxu0 0.0
    %589 = vmatpush1.msra.mxu0 %v204
    %590 = vmatprep.subr.mxu0 0.0
    %591 = vmatpush1.msra.mxu0 %v205
    %592 = vmatprep.subr.mxu0 0.0
    %593 = vmatpush1.msra.mxu0 %v206
    %594 = vmatprep.subr.mxu0 0.0
    %595 = vmatpush1.msra.mxu0 %v207
    %596 = vmatprep.subr.mxu0 0.0
    %597 = vmatpush1.msra.mxu0 0.0
    %598 = vmatprep.subr.mxu0 0.0
    %599 = vmatpush1.msra.mxu0 0.0
    %600 = vmatprep.subr.mxu0 0.0
    %601 = vmatpush1.msra.mxu0 0.0
    %602 = vmatprep.subr.mxu0 0.0
    %603 = vmatpush1.msra.mxu0 0.0
    %604 = vmatprep.subr.mxu0 0.0
    %605 = vmatpush1.msra.mxu0 0.0
    %606 = vmatprep.subr.mxu0 0.0
    %607 = vmatpush1.msra.mxu0 0.0
    %608 = vmatprep.subr.mxu0 0.0
    %609 = vmatpush1.msra.mxu0 0.0
    %610 = vmatprep.subr.mxu0 0.0
    %611 = vmatpush1.msra.mxu0 0.0
    %612 = vmatprep.subr.mxu0 0.0
    %613 = vmatpush1.msra.mxu0 0.0
    %614 = vmatprep.subr.mxu0 0.0
    %615 = vmatpush1.msra.mxu0 0.0
    %616 = vmatprep.subr.mxu0 0.0
    %617 = vmatpush1.msra.mxu0 0.0
    %618 = vmatprep.subr.mxu0 0.0
    %619 = vmatpush1.msra.mxu0 0.0
    %620 = vmatprep.subr.mxu0 0.0
    %621 = vmatpush1.msra.mxu0 0.0
    %622 = vmatprep.subr.mxu0 0.0
    %623 = vmatpush1.msra.mxu0 0.0
    %624 = vmatprep.subr.mxu0 0.0
    %625 = vmatpush1.msra.mxu0 0.0
    %626 = vmatprep.subr.mxu0 0.0
    %627 = vmatpush1.msra.mxu0 0.0
    %628 = vmatprep.mubr.f32.mxu0 0.0
    %629 = vmatmul.mubr.f32.gmra.mrb[0].mxu0 %v483
    %v630 = vpop.f32.mrb[0].mxu0
    %v631 = vadd.f32 %v556, %v630
    %v632 = vpop.f32.mrb[0].mxu0
    %633 = vmatprep.mubr.f32.mxu0 0.0
    %634 = vmatmul.mubr.f32.gmra.mrb[0].mxu0 %v486
    %v635 = vpop.f32.mrb[0].mxu0
    %v636 = vadd.f32 %v561, %v635
    %v637 = vpop.f32.mrb[0].mxu0
    %638 = vdwg.mxu0
    %v639 = vadd.f32 %v487, %v631
    %v640 = vadd.f32 %v488, %v636
    %641 = vst [vmem:[#allocation2] sm:$0xff] %v639
    %642 = vst [vmem:[#allocation2 + $0x8] sm:$0xff] %v640
    // Predicated region
    $region30: #{tpu_custom_call.1} parent=1 // pred_check
      %p643 = pneg %p56
    $region31: #{tpu_custom_call.1} parent=1 // pred_check_branch
      %645 = sbr.rel (%p643) target = $region33
    $region32: #{tpu_custom_call.1} parent=1 // pred_region
      %v646 = vld [vmem:[#allocation2] sm:$0xff]
      %v647 = vld [vmem:[#allocation2 + $0x8] sm:$0xff]
      %648 = vst [vmem:[#allocation9] sm:$0xff] %v646
      %649 = vst [vmem:[#allocation9 + $0x8] sm:$0xff] %v647
    $region33: #{tpu_custom_call.1} parent=1 // pred_fallthru
      _
    // Predicated region
    $region34: #{tpu_custom_call.1} parent=1 // pred_check
      _
    $region35: #{tpu_custom_call.1} parent=1 // pred_check_branch
      %651 = sbr.rel (0) target = $region37
    $region36: #{tpu_custom_call.1} parent=1 // pred_region
      %s653 = ssub.s32 256, 256
      %654 = vsyncadd [#allocation5], %s653
      %s655 = sshll.u32 [#allocation9], 4
      %s656 = int_to_ptr.vmem [resolvable:$true] %s655
      %661 = dma.vmem_to_hbm [thread:$0]  %s656, 256, %s3, [#allocation5], 128, 128, 8
    $region37: #{tpu_custom_call.1} parent=1 // pred_fallthru
      _
    // Predicated region
    $region38: #{tpu_custom_call.1} parent=1 // pred_check
      _
    $region39: #{tpu_custom_call.1} parent=1 // pred_check_branch
      %663 = sbr.rel (0) target = $region41
    $region40: #{tpu_custom_call.1} parent=1 // pred_region
      %664 = dma.done [#allocation5], 256
    $region41: #{tpu_custom_call.1} parent=1 // pred_fallthru
      _
    %665 = vsyncpa [#allocation4], 1
    %666 = vsyncpa [#allocation7], 1
    %667 = vsyncpa [#allocation5], 1

</llo_original>
